<compile_context>
chip_gen: v6e
topology: v6e:2x2x1
jax: 0.10.0
libtpu: 0.0.40
codegen_flags: <defaults>
</compile_context>

<pallas_src>
import functools

import jax
import jax.numpy as jnp
from jax import lax
from jax.experimental import pallas as pl
from jax.experimental.pallas import tpu as pltpu


def _merge_block_kernel(x_ref, s_ref, w_ref, aff_ref, o_ref, tok_ref, *,
                        block_b, ntot, eps):
    # x_ref   : (bb, tN, C)        raw tokens (wtok + features), one N tile
    # s_ref   : (Ntot, tN)         gather/pool matrix tile (1/ms folded in)
    # w_ref   : (C, C_out)         fc weight, (in, out) layout (f32 or bf16)
    # aff_ref : (3, C_out) f32     rows: bias, gamma, beta
    # o_ref   : (bb*Ntot, C_out)   flattened output slab for this batch block
    # tok_ref : (bb*Ntot, C) f32   pooled-token accumulator (persists over k)
    k = pl.program_id(1)

    @pl.when(k == 0)
    def _init():
        tok_ref[...] = jnp.zeros_like(tok_ref)

    # Pool: slice + pad + group-mean + concat fused into one small matmul per
    # batch element, accumulated into the block-level slab (N-tile reduction).
    s = s_ref[...]                                               # (Ntot, tN)
    for i in range(block_b):                                     # bb is small & static
        xi = x_ref[i]                                            # (tN, C)
        tok_ref[pl.ds(i * ntot, ntot), :] += jnp.dot(
            s, xi, preferred_element_type=jnp.float32)

    @pl.when(k == pl.num_programs(1) - 1)
    def _finalize():
        tok = tok_ref[...]                                       # (bb*Ntot, C) f32
        w = w_ref[...]                                           # (C, C_out)
        # ONE fc matmul for the whole batch block (MXU, f32 accumulation).
        y = jnp.dot(tok.astype(w.dtype), w,
                    preferred_element_type=jnp.float32)          # (bb*Ntot, C_out)
        y = y + aff_ref[0:1, :]                                  # bias
        # One-pass LayerNorm stats: the two lane reductions are independent.
        mu = jnp.mean(y, axis=-1, keepdims=True)
        m2 = jnp.mean(y * y, axis=-1, keepdims=True)
        var = m2 - mu * mu
        out = (y - mu) * lax.rsqrt(var + eps) * aff_ref[1:2, :] + aff_ref[2:3, :]
        o_ref[...] = out.astype(o_ref.dtype)                     # one dense 2-D store


def _build_pool_matrix(num_wtok, T, ms, dtype):
    """(Ntot, N) gather/pool matrix with the 1/ms mean folded into pooled rows."""
    Tg = -(-T // ms)                     # ceil: matches torch pad-then-group
    Ntot = num_wtok + Tg
    N = num_wtok + T
    row = jnp.arange(Ntot)[:, None]      # (Ntot, 1)
    col = jnp.arange(N)[None, :]         # (1, N)
    is_wtok = row < num_wtok
    sel_wtok = (col == row) & is_wtok                    # identity on wtok rows
    g = row - num_wtok
    lo = num_wtok + g * ms
    sel_pool = (col >= lo) & (col < lo + ms) & jnp.logical_not(is_wtok)
    s = jnp.where(sel_wtok, 1.0, 0.0) + jnp.where(sel_pool, 1.0 / ms, 0.0)
    return s.astype(dtype), Ntot


def _pick_n_tile(N, n_block=None, target=2048):
    """N-axis tile: full N for short/ragged sequences, else a multiple of 128
    dividing N (bounds the per-step VMEM working set on v7x)."""
    if n_block is not None:
        assert N % n_block == 0 and (n_block == N or n_block % 128 == 0), n_block
        return n_block
    if N <= target or N % 128 != 0:
        # TODO(synk): pad/mask the tail so ragged long sequences tile too.
        return N
    best = 128
    for t in range(128, target + 1, 128):
        if N % t == 0:
            best = t
    return best


def _pick_batch_block(B, Ntot, cap_bb, fits):
    """Largest divisor of B that (a) keeps >= 4 grid steps along the batch axis
    when possible (>= 2 otherwise), (b) keeps the flattened (bb*Ntot, C_out)
    output block sublane-aligned, and (c) fits the VMEM budget."""
    divs = [d for d in range(1, B + 1) if B % d == 0]
    ok = [d for d in divs if (d * Ntot) % 8 == 0 or d == B]
    capped = [d for d in ok if d <= max(1, cap_bb)] or ok

    def pref(d):                       # (step-class, prefer larger bb inside class)
        steps = B // d
        cls = 0 if steps >= 4 else (1 if steps >= 2 else 2)
        return (cls, -d)

    for d in sorted(capped, key=pref):
        if fits(d):
            return d
    return min(ok)                      # best-effort fallback (smallest footprint)


def merge_block_forward(x, params, merge_scale, num_wtok, *,
                        block_b=8, n_block=None):
    """x: (B, N, C) -> (B, num_wtok + ceil((N-num_wtok)/ms), expand*C)."""
    w, b, gamma, beta = params["w"], params["b"], params["gamma"], params["beta"]
    B, N, C = x.shape
    C_out = w.shape[1]
    T = N - num_wtok
    ms = T if merge_scale == -1 else merge_scale

    # Keep the 1/ms fold exact: binary*2^-k is exact in bf16, otherwise use an
    # f32 S (the pool matmul then just promotes; fc stays in mm_dtype).
    ms_pow2 = ms > 0 and (ms & (ms - 1)) == 0
    s_dtype = jnp.float32 if (x.dtype == jnp.bfloat16 and not ms_pow2) else x.dtype
    s, Ntot = _build_pool_matrix(num_wtok, T, ms, s_dtype)

    mm_dtype = jnp.bfloat16 if x.dtype == jnp.bfloat16 else jnp.float32
    affine = jnp.stack([b, gamma, beta], axis=0).astype(jnp.float32)  # (3, C_out)

    tN = _pick_n_tile(N, n_block)
    num_k = N // tN

    # VMEM budget from actual shapes (double-buffered I/O + f32 tok scratch).
    x_item = jnp.dtype(x.dtype).itemsize
    s_item = jnp.dtype(s_dtype).itemsize
    w_item = jnp.dtype(mm_dtype).itemsize

    def vmem_bytes(bb):
        return (2 * bb * tN * C * x_item          # x double buffer
                + 2 * Ntot * tN * s_item          # S
                + 2 * C * C_out * w_item          # fc weight
                + 2 * 3 * C_out * 4               # bias/gamma/beta
                + 2 * bb * Ntot * C_out * x_item  # output double buffer
                + bb * Ntot * C * 4)              # tok scratch

    try:
        phys_vmem = getattr(pltpu.get_tpu_info(), "vmem_capacity_bytes",
                            64 * 1024 * 1024)
    except Exception:
        phys_vmem = 64 * 1024 * 1024              # v7x-safe default
    vmem_cap = (phys_vmem * 3) // 4

    bb = _pick_batch_block(B, Ntot, block_b, lambda d: vmem_bytes(d) <= vmem_cap)
    vmem_limit = int(min(vmem_cap, max(32 * 1024 * 1024, 2 * vmem_bytes(bb))))

    kernel = functools.partial(_merge_block_kernel, block_b=bb, ntot=Ntot,
                               eps=1e-5)
    out2d = pl.pallas_call(
        kernel,
        out_shape=jax.ShapeDtypeStruct((B * Ntot, C_out), x.dtype),
        grid_spec=pltpu.PrefetchScalarGridSpec(
            num_scalar_prefetch=0,
            grid=(B // bb, num_k),
            in_specs=[
                pl.BlockSpec((bb, tN, C), lambda i, k: (i, k, 0)),   # x tile
                pl.BlockSpec((Ntot, tN), lambda i, k: (0, k)),       # S tile (resident over i)
                pl.BlockSpec((C, C_out), lambda i, k: (0, 0)),       # fc weight (resident)
                pl.BlockSpec((3, C_out), lambda i, k: (0, 0)),       # bias/gamma/beta (resident)
            ],
            out_specs=pl.BlockSpec((bb * Ntot, C_out), lambda i, k: (i, 0)),
            scratch_shapes=[pltpu.VMEM((bb * Ntot, C), jnp.float32)],
        ),
        compiler_params=pltpu.CompilerParams(
            dimension_semantics=("parallel", "arbitrary"),
            vmem_limit_bytes=vmem_limit,
        ),
    )(x, s, w.astype(mm_dtype), affine)
    return out2d.reshape(B, Ntot, C_out)


def merge_block_reference(x, params, merge_scale, num_wtok):
    """Pure-JAX (f32) reference mirroring the PyTorch module."""
    w = params["w"].astype(jnp.float32)
    b = params["b"].astype(jnp.float32)
    gamma = params["gamma"].astype(jnp.float32)
    beta = params["beta"].astype(jnp.float32)
    xf = x.astype(jnp.float32)
    x_wtok = xf[:, :num_wtok, :]
    x_fea = xf[:, num_wtok:, :]
    B, T, C = x_fea.shape
    ms = T if merge_scale == -1 else merge_scale
    need_pad = T % ms
    if need_pad:
        x_fea = jnp.pad(x_fea, ((0, 0), (0, ms - need_pad), (0, 0)))
        T += ms - need_pad
    x_fea = x_fea.reshape(B, T // ms, ms, C).mean(axis=2)
    xs = jnp.concatenate([x_wtok, x_fea], axis=1)
    y = xs @ w + b
    mu = y.mean(-1, keepdims=True)
    var = ((y - mu) ** 2).mean(-1, keepdims=True)
    return (y - mu) / jnp.sqrt(var + 1e-5) * gamma + beta


if __name__ == "__main__":
    B = 8
    num_wtok = 4
    T = 13                 # ragged: 13 % 4 != 0 -> exercises pad-included averaging
    C = 64                 # in_channels -> C_out = 128 (lane-dense output stores)
    expand = 2
    merge_scale = 4
    C_out = C * expand

    key = jax.random.PRNGKey(0)
    kx, kw, kb, kg, kbeta, kx2 = jax.random.split(key, 6)
    x = jax.random.normal(kx, (B, num_wtok + T, C), dtype=jnp.float32)
    params = {
        "w": jax.random.normal(kw, (C, C_out), dtype=jnp.float32) * 0.1,
        "b": jax.random.normal(kb, (C_out,), dtype=jnp.float32) * 0.1,
        "gamma": 1.0 + 0.1 * jax.random.normal(kg, (C_out,), dtype=jnp.float32),
        "beta": 0.1 * jax.random.normal(kbeta, (C_out,), dtype=jnp.float32),
    }

    # 1) f32, merge_scale=4, ragged feature tail (grid = 4 batch blocks x 1).
    out = jax.block_until_ready(merge_block_forward(x, params, merge_scale, num_wtok))
    ref = merge_block_reference(x, params, merge_scale, num_wtok)
    assert out.shape == ref.shape, (out.shape, ref.shape)
    assert jnp.allclose(out, ref, atol=1e-4, rtol=1e-4), float(jnp.max(jnp.abs(out - ref)))

    # 2) f32, merge_scale = -1 (global pool over all feature tokens).
    out2 = jax.block_until_ready(merge_block_forward(x, params, -1, num_wtok))
    ref2 = merge_block_reference(x, params, -1, num_wtok)
    assert out2.shape == ref2.shape
    assert jnp.allclose(out2, ref2, atol=1e-4, rtol=1e-4), float(jnp.max(jnp.abs(out2 - ref2)))

    # 3) f32, num_wtok = 0 edge case.
    out3 = jax.block_until_ready(merge_block_forward(x, params, merge_scale, 0))
    ref3 = merge_block_reference(x, params, merge_scale, 0)
    assert out3.shape == ref3.shape
    assert jnp.allclose(out3, ref3, atol=1e-4, rtol=1e-4), float(jnp.max(jnp.abs(out3 - ref3)))

    # 4) bf16 activations -> bf16 MXU matmuls (f32 accumulation, f32 LN stats).
    xb16 = x.astype(jnp.bfloat16)
    out4 = jax.block_until_ready(merge_block_forward(xb16, params, merge_scale, num_wtok))
    ref4 = merge_block_reference(xb16, params, merge_scale, num_wtok)
    assert out4.dtype == jnp.bfloat16 and out4.shape == ref4.shape
    assert float(jnp.max(jnp.abs(out4.astype(jnp.float32) - ref4))) < 0.15

    # 5) Longer sequence exercising the N-tile reduction path (grid = 2 x 2).
    num_wtok5, T5 = 8, 248
    x5 = jax.random.normal(kx2, (B, num_wtok5 + T5, C), dtype=jnp.float32)
    out5 = jax.block_until_ready(
        merge_block_forward(x5, params, merge_scale, num_wtok5, n_block=128))
    ref5 = merge_block_reference(x5, params, merge_scale, num_wtok5)
    assert out5.shape == ref5.shape
    assert jnp.allclose(out5, ref5, atol=1e-4, rtol=1e-4), float(jnp.max(jnp.abs(out5 - ref5)))

    print("KERNEL_OK")
</pallas_src>

<mosaic_0001>
module attributes {stable_mosaic.version = 11 : i64} {
  func.func @_merge_block_kernel(%arg0: i32, %arg1: i32, %arg2: memref<2x17x64xf32, #tpu.memory_space<vmem>>, %arg3: memref<8x17xf32, #tpu.memory_space<vmem>>, %arg4: memref<64x128xf32, #tpu.memory_space<vmem>>, %arg5: memref<3x128xf32, #tpu.memory_space<vmem>>, %arg6: memref<16x128xf32, #tpu.memory_space<vmem>>, %arg7: memref<16x64xf32, #tpu.memory_space<vmem>>) attributes {dimension_semantics = [#tpu.dimension_semantics<parallel>, #tpu.dimension_semantics<arbitrary>], iteration_bounds = array<i64: 4, 1>, scalar_prefetch = 0 : i64, scratch_operands = 1 : i64, tpu.core_type = #tpu.core_type<tc>, window_params = [{transform_indices = @transform_0, window_bounds = array<i64: 2, 17, 64>}, {transform_indices = @transform_1, window_bounds = array<i64: 8, 17>}, {pipeline_mode = #tpu.pipeline_mode<synchronous>, transform_indices = @transform_2, window_bounds = array<i64: 64, 128>}, {pipeline_mode = #tpu.pipeline_mode<synchronous>, transform_indices = @transform_3, window_bounds = array<i64: 3, 128>}, {transform_indices = @transform_4, window_bounds = array<i64: 16, 128>}]} {
    %c0_i32 = arith.constant 0 : i32
    %0 = arith.cmpi eq, %arg1, %c0_i32 : i32
    %1 = arith.extui %0 : i1 to i32
    %c0_i32_0 = arith.constant 0 : i32
    %2 = arith.cmpi ne, %1, %c0_i32_0 : i32
    scf.if %2 {
      %cst_17 = arith.constant 0.000000e+00 : f32
      %19 = vector.broadcast %cst_17 : f32 to vector<16x64xf32>
      %c0_18 = arith.constant 0 : index
      %c0_19 = arith.constant 0 : index
      %20 = vector.load %arg7[%c0_18, %c0_19] : memref<16x64xf32, #tpu.memory_space<vmem>>, vector<16x64xf32>
      tpu.vector_store %arg7[%c0_18, %c0_19], %19 {strides = array<i32>} : memref<16x64xf32, #tpu.memory_space<vmem>>, vector<16x64xf32>,
    } else {
    }
    %c0 = arith.constant 0 : index
    %c0_1 = arith.constant 0 : index
    %3 = vector.load %arg3[%c0, %c0_1] : memref<8x17xf32, #tpu.memory_space<vmem>>, vector<8x17xf32>
    %c0_2 = arith.constant 0 : index
    %c0_3 = arith.constant 0 : index
    %c0_4 = arith.constant 0 : index
    %4 = vector.load %arg2[%c0_2, %c0_3, %c0_4] : memref<2x17x64xf32, #tpu.memory_space<vmem>>, vector<1x17x64xf32>
    %5 = vector.shape_cast %4 : vector<1x17x64xf32> to vector<17x64xf32>
    %c0_5 = arith.constant 0 : index
    %c0_6 = arith.constant 0 : index
    %6 = vector.load %arg7[%c0_5, %c0_6] : memref<16x64xf32, #tpu.memory_space<vmem>>, vector<8x64xf32>
    %cst = arith.constant dense<0.000000e+00> : vector<8x64xf32>
    %7 = tpu.matmul %3, %5, %cst {dimension_numbers = #tpu.dot_dimension_numbers<[1], [0], [0], [1], [0, 0, 1, 1], [], []>} : vector<8x17xf32>, vector<17x64xf32>, vector<8x64xf32> -> vector<8x64xf32>
    %8 = arith.addf %6, %7 : vector<8x64xf32>
    %c0_7 = arith.constant 0 : index
    %c0_8 = arith.constant 0 : index
    %9 = vector.load %arg7[%c0_7, %c0_8] : memref<16x64xf32, #tpu.memory_space<vmem>>, vector<8x64xf32>
    tpu.vector_store %arg7[%c0_7, %c0_8], %8 {strides = array<i32>} : memref<16x64xf32, #tpu.memory_space<vmem>>, vector<8x64xf32>,
    %c1 = arith.constant 1 : index
    %c0_9 = arith.constant 0 : index
    %c0_10 = arith.constant 0 : index
    %10 = vector.load %arg2[%c1, %c0_9, %c0_10] : memref<2x17x64xf32, #tpu.memory_space<vmem>>, vector<1x17x64xf32>
    %11 = vector.shape_cast %10 : vector<1x17x64xf32> to vector<17x64xf32>
    %c8 = arith.constant 8 : index
    %c0_11 = arith.constant 0 : index
    %12 = vector.load %arg7[%c8, %c0_11] : memref<16x64xf32, #tpu.memory_space<vmem>>, vector<8x64xf32>
    %cst_12 = arith.constant dense<0.000000e+00> : vector<8x64xf32>
    %13 = tpu.matmul %3, %11, %cst_12 {dimension_numbers = #tpu.dot_dimension_numbers<[1], [0], [0], [1], [0, 0, 1, 1], [], []>} : vector<8x17xf32>, vector<17x64xf32>, vector<8x64xf32> -> vector<8x64xf32>
    %14 = arith.addf %12, %13 : vector<8x64xf32>
    %c8_13 = arith.constant 8 : index
    %c0_14 = arith.constant 0 : index
    %15 = vector.load %arg7[%c8_13, %c0_14] : memref<16x64xf32, #tpu.memory_space<vmem>>, vector<8x64xf32>
    tpu.vector_store %arg7[%c8_13, %c0_14], %14 {strides = array<i32>} : memref<16x64xf32, #tpu.memory_space<vmem>>, vector<8x64xf32>,
    %c0_i32_15 = arith.constant 0 : i32
    %16 = arith.cmpi eq, %arg1, %c0_i32_15 : i32
    %17 = arith.extui %16 : i1 to i32
    %c0_i32_16 = arith.constant 0 : i32
    %18 = arith.cmpi ne, %17, %c0_i32_16 : i32
    scf.if %18 {
      %c0_17 = arith.constant 0 : index
      %c0_18 = arith.constant 0 : index
      %19 = vector.load %arg7[%c0_17, %c0_18] : memref<16x64xf32, #tpu.memory_space<vmem>>, vector<16x64xf32>
      %c0_19 = arith.constant 0 : index
      %c0_20 = arith.constant 0 : index
      %20 = vector.load %arg4[%c0_19, %c0_20] : memref<64x128xf32, #tpu.memory_space<vmem>>, vector<64x128xf32>
      %cst_21 = arith.constant dense<0.000000e+00> : vector<16x128xf32>
      %21 = tpu.matmul %19, %20, %cst_21 {dimension_numbers = #tpu.dot_dimension_numbers<[1], [0], [0], [1], [0, 0, 1, 1], [], []>} : vector<16x64xf32>, vector<64x128xf32>, vector<16x128xf32> -> vector<16x128xf32>
      %c0_22 = arith.constant 0 : index
      %c0_23 = arith.constant 0 : index
      %22 = vector.load %arg5[%c0_22, %c0_23] : memref<3x128xf32, #tpu.memory_space<vmem>>, vector<1x128xf32>
      %23 = vector.broadcast %22 : vector<1x128xf32> to vector<16x128xf32>
      %24 = arith.addf %21, %23 : vector<16x128xf32>
      %cst_24 = arith.constant dense<0.000000e+00> : vector<16xf32>
      %25 = vector.multi_reduction <add>, %24, %cst_24 [1] : vector<16x128xf32> to vector<16xf32>
      %26 = vector.shape_cast %25 : vector<16xf32> to vector<16x1xf32>
      %cst_25 = arith.constant 1.280000e+02 : f32
      %27 = vector.broadcast %cst_25 : f32 to vector<16x1xf32>
      %28 = arith.divf %26, %27 : vector<16x1xf32>
      %29 = arith.mulf %24, %24 : vector<16x128xf32>
      %cst_26 = arith.constant dense<0.000000e+00> : vector<16xf32>
      %30 = vector.multi_reduction <add>, %29, %cst_26 [1] : vector<16x128xf32> to vector<16xf32>
      %31 = vector.shape_cast %30 : vector<16xf32> to vector<16x1xf32>
      %cst_27 = arith.constant 1.280000e+02 : f32
      %32 = vector.broadcast %cst_27 : f32 to vector<16x1xf32>
      %33 = arith.divf %31, %32 : vector<16x1xf32>
      %34 = arith.mulf %28, %28 : vector<16x1xf32>
      %35 = arith.subf %33, %34 : vector<16x1xf32>
      %36 = vector.broadcast %28 : vector<16x1xf32> to vector<16x128xf32>
      %37 = arith.subf %24, %36 : vector<16x128xf32>
      %cst_28 = arith.constant 9.99999974E-6 : f32
      %38 = vector.broadcast %cst_28 : f32 to vector<16x1xf32>
      %39 = arith.addf %35, %38 : vector<16x1xf32>
      %40 = math.rsqrt %39 : vector<16x1xf32>
      %41 = vector.broadcast %40 : vector<16x1xf32> to vector<16x128xf32>
      %42 = arith.mulf %37, %41 : vector<16x128xf32>
      %c1_29 = arith.constant 1 : index
      %c0_30 = arith.constant 0 : index
      %43 = vector.load %arg5[%c1_29, %c0_30] : memref<3x128xf32, #tpu.memory_space<vmem>>, vector<1x128xf32>
      %44 = vector.broadcast %43 : vector<1x128xf32> to vector<16x128xf32>
      %45 = arith.mulf %42, %44 : vector<16x128xf32>
      %c2 = arith.constant 2 : index
      %c0_31 = arith.constant 0 : index
      %46 = vector.load %arg5[%c2, %c0_31] : memref<3x128xf32, #tpu.memory_space<vmem>>, vector<1x128xf32>
      %47 = vector.broadcast %46 : vector<1x128xf32> to vector<16x128xf32>
      %48 = arith.addf %45, %47 : vector<16x128xf32>
      %c0_32 = arith.constant 0 : index
      %c0_33 = arith.constant 0 : index
      %49 = vector.load %arg6[%c0_32, %c0_33] : memref<16x128xf32, #tpu.memory_space<vmem>>, vector<16x128xf32>
      tpu.vector_store %arg6[%c0_32, %c0_33], %48 {strides = array<i32>} : memref<16x128xf32, #tpu.memory_space<vmem>>, vector<16x128xf32>,
    } else {
    }
    return
  }
  func.func @transform_0(%arg0: i32, %arg1: i32) -> (i32, i32, i32) {
    %c0_i32 = arith.constant 0 : i32
    %c0_i32_0 = arith.constant 0 : i32
    return %arg0, %arg1, %c0_i32 : i32, i32, i32
  }
  func.func @transform_1(%arg0: i32, %arg1: i32) -> (i32, i32) {
    %c0_i32 = arith.constant 0 : i32
    %c0_i32_0 = arith.constant 0 : i32
    return %c0_i32, %arg1 : i32, i32
  }
  func.func @transform_2(%arg0: i32, %arg1: i32) -> (i32, i32) {
    %c0_i32 = arith.constant 0 : i32
    %c0_i32_0 = arith.constant 0 : i32
    %c0_i32_1 = arith.constant 0 : i32
    return %c0_i32, %c0_i32_0 : i32, i32
  }
  func.func @transform_3(%arg0: i32, %arg1: i32) -> (i32, i32) {
    %c0_i32 = arith.constant 0 : i32
    %c0_i32_0 = arith.constant 0 : i32
    %c0_i32_1 = arith.constant 0 : i32
    return %c0_i32, %c0_i32_0 : i32, i32
  }
  func.func @transform_4(%arg0: i32, %arg1: i32) -> (i32, i32) {
    %c0_i32 = arith.constant 0 : i32
    %c0_i32_0 = arith.constant 0 : i32
    return %arg0, %c0_i32 : i32, i32
  }
}

</mosaic_0001>

<llo_original>
// kernel: tpu_custom_call.1
$region0: #{tpu_custom_call.1}
  #allocation0 [shape = 'u32[]', space=smem, size = 0x4, offset = 0x4, fixed_abs, tag = 'smem constant byte address 0x4 - core index']
  #allocation1 [shape = 'u32[144,128]{1,0:T(1,128)}', space=vmem, size = 0x12000, scoped, tag = 'internal scratch']
  #allocation2 [shape = 'f32[16,64]{1,0:T(8,128)}', space=vmem, size = 0x2000, scoped, tag = 'scratch operand']
  %s0 = inlined_call_operand.vmem [shape: f32[8,17,64], index: 0, kind: input, shape index: {}]
  %s1 = inlined_call_operand.vmem [shape: f32[8,17], index: 1, kind: input, shape index: {}]
  %s2 = inlined_call_operand.vmem [shape: f32[64,128], index: 2, kind: input, shape index: {}]
  %s3 = inlined_call_operand.vmem [shape: f32[3,128], index: 3, kind: input, shape index: {}]
  %s4 = inlined_call_operand.hbm [shape: f32[64,128], index: 4, kind: output, shape index: {}]
  %s5 = sld [smem:[#allocation0]]
  $region57: #{tpu_custom_call.1} parent=0
    _
  %s7 = ssub.s32 1, %s5
  %s8 = scalar_select 0, %s7, %s5
  $region1: #{tpu_custom_call.1} parent=0
    #allocation3 [shape = 'u8[16384]{0}', space=vmem, size = 0x4000, scoped, tag = 'output window, operand 0']
    #allocation4 [shape = 's32[2]{0}', space=sflag, size = 0x8, scoped, tag = 'scoped memory for tpu_custom_call.1']
    %9 = vsyncpa [#allocation4], 0
    %s10 = scalar_lea.sflag [#allocation4], 1
    %11 = vsyncpa %s10, 0
    loop: start=0, step=1, limit=6
    $region2: #{tpu_custom_call.1} parent=1 // loop_pre_header
      _
    $region3: #{tpu_custom_call.1} parent=1 // loop_header
      %s13 = sphi 0, %s17
      %p14 = scmp.ge.s32.totalorder %s13, 6
      %s20 = sphi 0, %s32
      %s21 = sphi 0, %s28
      %s22 = sphi 0, %s20
      %s23 = sphi 0, %s21
      %s24 = sphi 0, %s22
      %s25 = sphi 0, %s23
      %s37 = sphi 0, %s39
      %s40 = sphi 0, %s37
      %s41 = sphi 0, %s40
      %s57 = sphi 0, %s41
      %s63 = sphi 0, %s65
      %s66 = sphi 0, %s63
      %s67 = sphi 0, %s66
      %s83 = sphi 0, %s67
      %s87 = sphi 0, %s87
      %s89 = sphi 0, %s87
      %s90 = sphi 0, %s89
      %s104 = sphi 0, %s90
      %s108 = sphi 0, %s108
      %s110 = sphi 0, %s108
      %s111 = sphi 0, %s110
      %s125 = sphi 0, %s111
      %s131 = sphi 0, %s133
      %s134 = sphi 0, %s131
      %s135 = sphi 0, %s134
      %s151 = sphi 0, %s135
    $region4: #{tpu_custom_call.1} parent=1 // loop_header_branch
      %16 = sbr.rel (%p14) target = $region8
    $region5: #{tpu_custom_call.1} parent=1 // loop_body
      %s18 = ssub.s32 %s13, 1
      %s19 = ssub.s32 %s13, 2
      %s26 = sadd.s32 1, %s21
      %p27 = scmp.ge.s32.totalorder %s26, 1
      %s28 = scalar_select %p27, 0, %s26
      %s29 = sadd.s32 1, %s20
      %s30 = scalar_select %p27, %s29, %s20
      %p31 = scmp.ge.s32.totalorder %s30, 4
      %s32 = scalar_select %p31, 0, %s30
      %s33 = ssub.s32 %s20, %s32
      %s34 = ssub.s32 %s21, %s28
      %s35 = sor.u32 %s33, %s34
      %p36 = scmp.eq.s32.totalorder %s35, 0
      %s38 = sadd.s32 %s37, 1
      %s39 = scalar_select %p36, %s37, %s38
      %p42 = pneg %p36
      %p43 = scmp.eq.s32.totalorder %s13, 3
      %p44 = por %p42, %p43
      %p45 = scmp.ne.s32.totalorder %s37, %s40
      %p46 = scmp.eq.s32.totalorder %s13, 0
      %p47 = por %p45, %p46
      %p48 = scmp.ne.s32.totalorder %s37, %s40
      %p49 = scmp.eq.s32.totalorder %s18, 3
      %p50 = por %p48, %p49
      %p51 = scmp.ne.s32.totalorder %s40, %s41
      %p52 = scmp.eq.s32.totalorder %s18, 0
      %p53 = por %p51, %p52
      %p54 = scmp.ne.s32.totalorder %s40, %s41
      %p55 = scmp.eq.s32.totalorder %s19, 3
      %p56 = por %p54, %p55
      %p58 = scmp.ne.s32.totalorder %s41, %s57
      %p59 = scmp.eq.s32.totalorder %s19, 0
      %p60 = por %p58, %p59
      %s61 = ssub.s32 %s21, %s28
      %p62 = scmp.eq.s32.totalorder %s61, 0
      %s64 = sadd.s32 %s63, 1
      %s65 = scalar_select %p62, %s63, %s64
      %p68 = pneg %p62
      %p69 = scmp.eq.s32.totalorder %s13, 3
      %p70 = por %p68, %p69
      %p71 = scmp.ne.s32.totalorder %s63, %s66
      %p72 = scmp.eq.s32.totalorder %s13, 0
      %p73 = por %p71, %p72
      %p74 = scmp.ne.s32.totalorder %s63, %s66
      %p75 = scmp.eq.s32.totalorder %s18, 3
      %p76 = por %p74, %p75
      %p77 = scmp.ne.s32.totalorder %s66, %s67
      %p78 = scmp.eq.s32.totalorder %s18, 0
      %p79 = por %p77, %p78
      %p80 = scmp.ne.s32.totalorder %s66, %s67
      %p81 = scmp.eq.s32.totalorder %s19, 3
      %p82 = por %p80, %p81
      %p84 = scmp.ne.s32.totalorder %s67, %s83
      %p85 = scmp.eq.s32.totalorder %s19, 0
      %p86 = por %p84, %p85
      %s88 = sadd.s32 %s87, 1
      %p91 = scmp.eq.s32.totalorder %s13, 3
      %p92 = scmp.ne.s32.totalorder %s87, %s89
      %p93 = scmp.eq.s32.totalorder %s13, 0
      %p94 = por %p92, %p93
      %p95 = scmp.ne.s32.totalorder %s87, %s89
      %p96 = scmp.eq.s32.totalorder %s18, 3
      %p97 = por %p95, %p96
      %p98 = scmp.ne.s32.totalorder %s89, %s90
      %p99 = scmp.eq.s32.totalorder %s18, 0
      %p100 = por %p98, %p99
      %p101 = scmp.ne.s32.totalorder %s89, %s90
      %p102 = scmp.eq.s32.totalorder %s19, 3
      %p103 = por %p101, %p102
      %p105 = scmp.ne.s32.totalorder %s90, %s104
      %p106 = scmp.eq.s32.totalorder %s19, 0
      %p107 = por %p105, %p106
      %s109 = sadd.s32 %s108, 1
      %p112 = scmp.eq.s32.totalorder %s13, 3
      %p113 = scmp.ne.s32.totalorder %s108, %s110
      %p114 = scmp.eq.s32.totalorder %s13, 0
      %p115 = por %p113, %p114
      %p116 = scmp.ne.s32.totalorder %s108, %s110
      %p117 = scmp.eq.s32.totalorder %s18, 3
      %p118 = por %p116, %p117
      %p119 = scmp.ne.s32.totalorder %s110, %s111
      %p120 = scmp.eq.s32.totalorder %s18, 0
      %p121 = por %p119, %p120
      %p122 = scmp.ne.s32.totalorder %s110, %s111
      %p123 = scmp.eq.s32.totalorder %s19, 3
      %p124 = por %p122, %p123
      %p126 = scmp.ne.s32.totalorder %s111, %s125
      %p127 = scmp.eq.s32.totalorder %s19, 0
      %p128 = por %p126, %p127
      %s129 = ssub.s32 %s20, %s32
      %p130 = scmp.eq.s32.totalorder %s129, 0
      %s132 = sadd.s32 %s131, 1
      %s133 = scalar_select %p130, %s131, %s132
      %p136 = pneg %p130
      %p137 = scmp.eq.s32.totalorder %s13, 3
      %p138 = por %p136, %p137
      %p139 = scmp.ne.s32.totalorder %s131, %s134
      %p140 = scmp.eq.s32.totalorder %s13, 0
      %p141 = por %p139, %p140
      %p142 = scmp.ne.s32.totalorder %s131, %s134
      %p143 = scmp.eq.s32.totalorder %s18, 3
      %p144 = por %p142, %p143
      %p145 = scmp.ne.s32.totalorder %s134, %s135
      %p146 = scmp.eq.s32.totalorder %s18, 0
      %p147 = por %p145, %p146
      %p148 = scmp.ne.s32.totalorder %s134, %s135
      %p149 = scmp.eq.s32.totalorder %s19, 3
      %p150 = por %p148, %p149
      %p152 = scmp.ne.s32.totalorder %s135, %s151
      %p153 = scmp.eq.s32.totalorder %s19, 0
      %p154 = por %p152, %p153
      %p155 = scmp.le.s32.totalorder 1, %s13
      %p156 = scmp.lt.s32.totalorder %s13, 5
      %p157 = pnand %p155, %p156
      %p158 = pneg %p157
      // Predicated region
      $region9: #{tpu_custom_call.1} parent=5 // pred_check
        _
      $region10: #{tpu_custom_call.1} parent=5 // pred_check_branch
        %160 = sbr.rel (%p157) target = $region12
      $region11: #{tpu_custom_call.1} parent=5 // pred_region
        %s161 = ssub.s32 %s13, 1
        // Predicated region
        $region13: #{tpu_custom_call.1} parent=11 // pred_check
          %p162 = pneg %p79
        $region14: #{tpu_custom_call.1} parent=11 // pred_check_branch
          %164 = sbr.rel (%p162) target = $region16
        $region15: #{tpu_custom_call.1} parent=11 // pred_region
          %p165 = scmp.lt.s32.totalorder %s23, 0
          %s166 = scalar_select %p165, %s23, 0
          %s167 = smul.addr %s166, 8
          %s168 = scalar_lea.vmem %s1, %s167
        $region16: #{tpu_custom_call.1} parent=11 // pred_fallthru
          _
        // Predicated region
        $region17: #{tpu_custom_call.1} parent=11 // pred_check
          %p169 = pneg %p100
        $region18: #{tpu_custom_call.1} parent=11 // pred_check_branch
          %171 = sbr.rel (%p169) target = $region20
        $region19: #{tpu_custom_call.1} parent=11 // pred_region
          _
        $region20: #{tpu_custom_call.1} parent=11 // pred_fallthru
          _
        // Predicated region
        $region21: #{tpu_custom_call.1} parent=11 // pred_check
          %p172 = pneg %p121
        $region22: #{tpu_custom_call.1} parent=11 // pred_check_branch
          %174 = sbr.rel (%p172) target = $region24
        $region23: #{tpu_custom_call.1} parent=11 // pred_region
          _
        $region24: #{tpu_custom_call.1} parent=11 // pred_fallthru
          _
      $region12: #{tpu_custom_call.1} parent=5 // pred_fallthru
        _
      %p175 = scmp.lt.s32.totalorder %s13, 4
      // Predicated region
      $region25: #{tpu_custom_call.1} parent=5 // pred_check
        %p176 = pneg %p175
      $region26: #{tpu_custom_call.1} parent=5 // pred_check_branch
        %178 = sbr.rel (%p176) target = $region28
      $region27: #{tpu_custom_call.1} parent=5 // pred_region
        // Predicated region
        $region29: #{tpu_custom_call.1} parent=27 // pred_check
          %p179 = pneg %p47
        $region30: #{tpu_custom_call.1} parent=27 // pred_check_branch
          %181 = sbr.rel (%p179) target = $region32
        $region31: #{tpu_custom_call.1} parent=27 // pred_region
          %s182 = smul.u32 2, %s20
          %s183 = smul.u32 3, %s21
          %p184 = scmp.lt.s32.totalorder %s182, 7
          %s185 = scalar_select %p184, %s182, 7
          %p186 = scmp.lt.s32.totalorder %s183, 2
          %s187 = scalar_select %p186, %s183, 2
          %s188 = smul.addr %s185, 3
          %s189 = sadd.s32 %s187, %s188
          %s190 = smul.addr %s189, 8
          %s191 = scalar_lea.vmem %s0, %s190
          %s192 = smul.u32 2, %s20
          %s193 = smul.u32 3, %s21
        $region32: #{tpu_custom_call.1} parent=27 // pred_fallthru
          _
      $region28: #{tpu_custom_call.1} parent=5 // pred_fallthru
        _
      %p194 = scmp.le.s32.totalorder 1, %s13
      %p195 = scmp.lt.s32.totalorder %s13, 5
      %p196 = pnand %p194, %p195
      %p197 = pneg %p196
      // Predicated region
      $region33: #{tpu_custom_call.1} parent=5 // pred_check
        _
      $region34: #{tpu_custom_call.1} parent=5 // pred_check_branch
        %199 = sbr.rel (%p196) target = $region36
      $region35: #{tpu_custom_call.1} parent=5 // pred_region
        %s200 = ssub.s32 %s13, 1
        %s201 = smul.u32 2, %s22
        %s202 = smul.u32 3, %s23
        %p203 = scmp.lt.s32.totalorder %s201, 7
        %s204 = scalar_select %p203, %s201, 7
        %p205 = scmp.lt.s32.totalorder %s202, 2
        %s206 = scalar_select %p205, %s202, 2
        %s207 = smul.addr %s204, 3
        %s208 = sadd.s32 %s206, %s207
        %s209 = smul.addr %s208, 8
        %s210 = scalar_lea.vmem %s0, %s209
        %p211 = pneg %p53
        %p212 = pneg %p50
        %p213 = scmp.lt.s32.totalorder %s23, 0
        %s214 = scalar_select %p213, %s23, 0
        %s215 = smul.addr %s214, 8
        %s216 = scalar_lea.vmem %s1, %s215
        %p217 = pneg %p79
        %p218 = pneg %p76
        %p219 = pneg %p100
        %p220 = pneg %p97
        %p221 = pneg %p121
        %p222 = pneg %p118
        %p223 = pneg %p147
        %p224 = pneg %p144
        %s225 = sand.u32 %s134, 1
        %s226 = scalar_lea.sflag [#allocation4], %s225
        %s227 = sand.u32 %s134, 1
        %s228 = smul.addr %s227, 16
        %s229 = scalar_lea.vmem [#allocation3], %s228
        %s230 = smul.u32 2, %s22
        %s231 = smul.u32 3, %s23
        %p232 = scmp.lt.s32.totalorder %s230, 7
        %s233 = scalar_select %p232, %s230, 7
        %p234 = scmp.lt.s32.totalorder %s231, 2
        %s235 = scalar_select %p234, %s231, 2
        %s236 = smul.addr %s233, 3
        %s237 = sadd.s32 %s235, %s236
        %s238 = smul.addr %s237, 8
        %s239 = scalar_lea.vmem %s0, %s238
        %s240 = smul.u32 2, %s22
        %s241 = smul.u32 3, %s23
        %p242 = scmp.lt.s32.totalorder %s23, 0
        %s243 = scalar_select %p242, %s23, 0
        %s244 = smul.addr %s243, 8
        %s245 = scalar_lea.vmem %s1, %s244
        %s246 = smul.u32 2, %s22
        %p247 = scmp.eq.s32.totalorder %s23, 0
        // Predicated region
        $region37: #{tpu_custom_call.1} parent=35 // pred_check
          %p248 = pneg %p247
        $region38: #{tpu_custom_call.1} parent=35 // pred_check_branch
          %250 = sbr.rel (%p248) target = $region40
        $region39: #{tpu_custom_call.1} parent=35 // pred_region
          %vm251 = vcmask 523264
          %252 = vst.msk [vmem:[#allocation2] sm:$0xff] %vm251, 0.0
          %253 = vst.msk [vmem:[#allocation2 + $0x8] sm:$0xff] %vm251, 0.0
        $region40: #{tpu_custom_call.1} parent=35 // pred_fallthru
          _
        %v254 = vld [vmem:[%s245] sm:$0xff]
        %v255 = vld [vmem:[%s239] sm:$0xff]
        %v256 = vld [vmem:[%s239 + $0x8] sm:$0xff]
        %v257 = vld [vmem:[%s239 + $0x10] sm:$0x1]
        %v258 = vld [vmem:[#allocation2] sm:$0xff]
        %vm259 = vcmask 138240
        %v261 = vsel %vm259, %v254, 0
        %vm263 = vcmask 1040384
        %v265 = vsel %vm263, %v257, 0
        %267 = vmatprep.subr.mxu0 0.0
        %268 = vmatpush1.msra.mxu0 0.0
        %269 = vmatprep.subr.mxu0 0.0
        %270 = vmatpush1.msra.mxu0 0.0
        %271 = vmatprep.subr.mxu0 0.0
        %272 = vmatpush1.msra.mxu0 0.0
        %273 = vmatprep.subr.mxu0 0.0
        %274 = vmatpush1.msra.mxu0 0.0
        %275 = vmatprep.subr.mxu0 0.0
        %276 = vmatpush1.msra.mxu0 0.0
        %277 = vmatprep.subr.mxu0 0.0
        %278 = vmatpush1.msra.mxu0 0.0
        %279 = vmatprep.subr.mxu0 0.0
        %280 = vmatpush1.msra.mxu0 0.0
        %281 = vmatprep.subr.mxu0 0.0
        %282 = vmatpush1.msra.mxu0 0.0
        %283 = vmatprep.subr.mxu0 0.0
        %284 = vmatpush1.msra.mxu0 0.0
        %285 = vmatprep.subr.mxu0 0.0
        %286 = vmatpush1.msra.mxu0 0.0
        %287 = vmatprep.subr.mxu0 0.0
        %288 = vmatpush1.msra.mxu0 0.0
        %289 = vmatprep.subr.mxu0 0.0
        %290 = vmatpush1.msra.mxu0 0.0
        %291 = vmatprep.subr.mxu0 0.0
        %292 = vmatpush1.msra.mxu0 0.0
        %293 = vmatprep.subr.mxu0 0.0
        %294 = vmatpush1.msra.mxu0 %v265
        %295 = vmatprep.subr.mxu0 0.0
        %296 = vmatpush1.msra.mxu0 %v256
        %297 = vmatprep.subr.mxu0 0.0
        %298 = vmatpush1.msra.mxu0 %v255
        %299 = vmatprep.subr.mxu0 0.0
        %300 = vmatpush2.msra.mxu0 0.0
        %301 = vmatprep.subr.mxu0 0.0
        %302 = vmatpush2.msra.mxu0 0.0
        %303 = vmatprep.subr.mxu0 0.0
        %304 = vmatpush2.msra.mxu0 0.0
        %305 = vmatprep.subr.mxu0 0.0
        %306 = vmatpush2.msra.mxu0 0.0
        %307 = vmatprep.subr.mxu0 0.0
        %308 = vmatpush2.msra.mxu0 0.0
        %309 = vmatprep.subr.mxu0 0.0
        %310 = vmatpush2.msra.mxu0 0.0
        %311 = vmatprep.subr.mxu0 0.0
        %312 = vmatpush2.msra.mxu0 0.0
        %313 = vmatprep.subr.mxu0 0.0
        %314 = vmatpush2.msra.mxu0 0.0
        %315 = vmatprep.subr.mxu0 0.0
        %316 = vmatpush2.msra.mxu0 0.0
        %317 = vmatprep.subr.mxu0 0.0
        %318 = vmatpush2.msra.mxu0 0.0
        %319 = vmatprep.subr.mxu0 0.0
        %320 = vmatpush2.msra.mxu0 0.0
        %321 = vmatprep.subr.mxu0 0.0
        %322 = vmatpush2.msra.mxu0 0.0
        %323 = vmatprep.subr.mxu0 0.0
        %324 = vmatpush2.msra.mxu0 0.0
        %325 = vmatprep.subr.mxu0 0.0
        %326 = vmatpush2.msra.mxu0 0.0
        %327 = vmatprep.subr.mxu0 0.0
        %328 = vmatpush2.msra.mxu0 0.0
        %329 = vmatprep.subr.mxu0 0.0
        %330 = vmatpush2.msra.mxu0 0.0
        %331 = vmatprep.mubr.f32.mxu0 0.0
        %332 = vmatmul.mubr.f32.gmra.mxu0 %v261
        %v333 = vpop.f32.mrf.mxu0
        %v334 = vadd.f32 0.0, %v333
        %v335 = vpop.f32.mrf.mxu0
        %336 = vdwg.mxu0
        %v337 = vadd.f32 %v258, %v334
        %vm338 = vcmask 523264
        %339 = vst.msk [vmem:[#allocation2] sm:$0xff] %vm338, %v337
        %s340 = scalar_lea.vmem %s239, 24
        %v341 = vld [vmem:[%s340] sm:$0xff]
        %v342 = vld [vmem:[%s340 + $0x8] sm:$0xff]
        %v343 = vld [vmem:[%s340 + $0x10] sm:$0x1]
        %v344 = vld [vmem:[#allocation2 + $0x8] sm:$0xff]
        %v346 = vsel %vm263, %v343, 0
        %348 = vmatprep.subr.mxu0 0.0
        %349 = vmatpush1.msra.mxu0 0.0
        %350 = vmatprep.subr.mxu0 0.0
        %351 = vmatpush1.msra.mxu0 0.0
        %352 = vmatprep.subr.mxu0 0.0
        %353 = vmatpush1.msra.mxu0 0.0
        %354 = vmatprep.subr.mxu0 0.0
        %355 = vmatpush1.msra.mxu0 0.0
        %356 = vmatprep.subr.mxu0 0.0
        %357 = vmatpush1.msra.mxu0 0.0
        %358 = vmatprep.subr.mxu0 0.0
        %359 = vmatpush1.msra.mxu0 0.0
        %360 = vmatprep.subr.mxu0 0.0
        %361 = vmatpush1.msra.mxu0 0.0
        %362 = vmatprep.subr.mxu0 0.0
        %363 = vmatpush1.msra.mxu0 0.0
        %364 = vmatprep.subr.mxu0 0.0
        %365 = vmatpush1.msra.mxu0 0.0
        %366 = vmatprep.subr.mxu0 0.0
        %367 = vmatpush1.msra.mxu0 0.0
        %368 = vmatprep.subr.mxu0 0.0
        %369 = vmatpush1.msra.mxu0 0.0
        %370 = vmatprep.subr.mxu0 0.0
        %371 = vmatpush1.msra.mxu0 0.0
        %372 = vmatprep.subr.mxu0 0.0
        %373 = vmatpush1.msra.mxu0 0.0
        %374 = vmatprep.subr.mxu0 0.0
        %375 = vmatpush1.msra.mxu0 %v346
        %376 = vmatprep.subr.mxu0 0.0
        %377 = vmatpush1.msra.mxu0 %v342
        %378 = vmatprep.subr.mxu0 0.0
        %379 = vmatpush1.msra.mxu0 %v341
        %380 = vmatprep.subr.mxu0 0.0
        %381 = vmatpush2.msra.mxu0 0.0
        %382 = vmatprep.subr.mxu0 0.0
        %383 = vmatpush2.msra.mxu0 0.0
        %384 = vmatprep.subr.mxu0 0.0
        %385 = vmatpush2.msra.mxu0 0.0
        %386 = vmatprep.subr.mxu0 0.0
        %387 = vmatpush2.msra.mxu0 0.0
        %388 = vmatprep.subr.mxu0 0.0
        %389 = vmatpush2.msra.mxu0 0.0
        %390 = vmatprep.subr.mxu0 0.0
        %391 = vmatpush2.msra.mxu0 0.0
        %392 = vmatprep.subr.mxu0 0.0
        %393 = vmatpush2.msra.mxu0 0.0
        %394 = vmatprep.subr.mxu0 0.0
        %395 = vmatpush2.msra.mxu0 0.0
        %396 = vmatprep.subr.mxu0 0.0
        %397 = vmatpush2.msra.mxu0 0.0
        %398 = vmatprep.subr.mxu0 0.0
        %399 = vmatpush2.msra.mxu0 0.0
        %400 = vmatprep.subr.mxu0 0.0
        %401 = vmatpush2.msra.mxu0 0.0
        %402 = vmatprep.subr.mxu0 0.0
        %403 = vmatpush2.msra.mxu0 0.0
        %404 = vmatprep.subr.mxu0 0.0
        %405 = vmatpush2.msra.mxu0 0.0
        %406 = vmatprep.subr.mxu0 0.0
        %407 = vmatpush2.msra.mxu0 0.0
        %408 = vmatprep.subr.mxu0 0.0
        %409 = vmatpush2.msra.mxu0 0.0
        %410 = vmatprep.subr.mxu0 0.0
        %411 = vmatpush2.msra.mxu0 0.0
        %412 = vmatprep.mubr.f32.mxu0 0.0
        %413 = vmatmul.mubr.f32.gmra.mxu0 %v261
        %v414 = vpop.f32.mrf.mxu0
        %v415 = vadd.f32 0.0, %v414
        %v416 = vpop.f32.mrf.mxu0
        %417 = vdwg.mxu0
        %v418 = vadd.f32 %v344, %v415
        %419 = vst.msk [vmem:[#allocation2 + $0x8] sm:$0xff] %vm338, %v418
        // Predicated region
        $region41: #{tpu_custom_call.1} parent=35 // pred_check
          %p420 = pneg %p247
        $region42: #{tpu_custom_call.1} parent=35 // pred_check_branch
          %422 = sbr.rel (%p420) target = $region44
        $region43: #{tpu_custom_call.1} parent=35 // pred_region
          %v423 = vld [vmem:[#allocation2] sm:$0xff]
          %v424 = vld [vmem:[#allocation2 + $0x8] sm:$0xff]
          %v425 = vld [vmem:[%s2] sm:$0xff]
          %v426 = vld [vmem:[%s2 + $0x8] sm:$0xff]
          %v427 = vld [vmem:[%s2 + $0x10] sm:$0xff]
          %v428 = vld [vmem:[%s2 + $0x18] sm:$0xff]
          %v429 = vld [vmem:[%s2 + $0x20] sm:$0xff]
          %v430 = vld [vmem:[%s2 + $0x28] sm:$0xff]
          %v431 = vld [vmem:[%s2 + $0x30] sm:$0xff]
          %v432 = vld [vmem:[%s2 + $0x38] sm:$0xff]
          %v433 = vld [vmem:[%s3] sm:$0x1]
          %v434 = vlaneseq
          %v435 = vshrl.u32 %v434, 7
          %v436 = vsub.s32 0, %v435
          %v437 = vrot.slane %v433, %v436
          %v439 = vsel %vm338, %v423, 0
          %v442 = vsel %vm338, %v424, 0
          %444 = vmatprep.subr.mxu0 0.0
          %445 = vmatpush1.msra.mxu0 0.0
          %446 = vmatprep.subr.mxu0 0.0
          %447 = vmatpush1.msra.mxu0 0.0
          %448 = vmatprep.subr.mxu0 0.0
          %449 = vmatpush1.msra.mxu0 0.0
          %450 = vmatprep.subr.mxu0 0.0
          %451 = vmatpush1.msra.mxu0 0.0
          %452 = vmatprep.subr.mxu0 0.0
          %453 = vmatpush1.msra.mxu0 0.0
          %454 = vmatprep.subr.mxu0 0.0
          %455 = vmatpush1.msra.mxu0 0.0
          %456 = vmatprep.subr.mxu0 0.0
          %457 = vmatpush1.msra.mxu0 0.0
          %458 = vmatprep.subr.mxu0 0.0
          %459 = vmatpush1.msra.mxu0 0.0
          %460 = vmatprep.subr.mxu0 0.0
          %461 = vmatpush1.msra.mxu0 %v432
          %462 = vmatprep.subr.mxu0 0.0
          %463 = vmatpush1.msra.mxu0 %v431
          %464 = vmatprep.subr.mxu0 0.0
          %465 = vmatpush1.msra.mxu0 %v430
          %466 = vmatprep.subr.mxu0 0.0
          %467 = vmatpush1.msra.mxu0 %v429
          %468 = vmatprep.subr.mxu0 0.0
          %469 = vmatpush1.msra.mxu0 %v428
          %470 = vmatprep.subr.mxu0 0.0
          %471 = vmatpush1.msra.mxu0 %v427
          %472 = vmatprep.subr.mxu0 0.0
          %473 = vmatpush1.msra.mxu0 %v426
          %474 = vmatprep.subr.mxu0 0.0
          %475 = vmatpush1.msra.mxu0 %v425
          %476 = vmatprep.subr.mxu0 0.0
          %477 = vmatpush2.msra.mxu0 0.0
          %478 = vmatprep.subr.mxu0 0.0
          %479 = vmatpush2.msra.mxu0 0.0
          %480 = vmatprep.subr.mxu0 0.0
          %481 = vmatpush2.msra.mxu0 0.0
          %482 = vmatprep.subr.mxu0 0.0
          %483 = vmatpush2.msra.mxu0 0.0
          %484 = vmatprep.subr.mxu0 0.0
          %485 = vmatpush2.msra.mxu0 0.0
          %486 = vmatprep.subr.mxu0 0.0
          %487 = vmatpush2.msra.mxu0 0.0
          %488 = vmatprep.subr.mxu0 0.0
          %489 = vmatpush2.msra.mxu0 0.0
          %490 = vmatprep.subr.mxu0 0.0
          %491 = vmatpush2.msra.mxu0 0.0
          %492 = vmatprep.subr.mxu0 0.0
          %493 = vmatpush2.msra.mxu0 0.0
          %494 = vmatprep.subr.mxu0 0.0
          %495 = vmatpush2.msra.mxu0 0.0
          %496 = vmatprep.subr.mxu0 0.0
          %497 = vmatpush2.msra.mxu0 0.0
          %498 = vmatprep.subr.mxu0 0.0
          %499 = vmatpush2.msra.mxu0 0.0
          %500 = vmatprep.subr.mxu0 0.0
          %501 = vmatpush2.msra.mxu0 0.0
          %502 = vmatprep.subr.mxu0 0.0
          %503 = vmatpush2.msra.mxu0 0.0
          %504 = vmatprep.subr.mxu0 0.0
          %505 = vmatpush2.msra.mxu0 0.0
          %506 = vmatprep.subr.mxu0 0.0
          %507 = vmatpush2.msra.mxu0 0.0
          %508 = vmatprep.mubr.f32.mxu0 0.0
          %509 = vmatmul.mubr.f32.gmra.mxu0 %v439
          %v510 = vpop.f32.mrf.mxu0
          %v511 = vadd.f32 %v437, %v510
          %v512 = vpop.f32.mrf.mxu0
          %513 = vmatprep.mubr.f32.mxu0 0.0
          %514 = vmatmul.mubr.f32.gmra.mxu0 %v442
          %v515 = vpop.f32.mrf.mxu0
          %v516 = vadd.f32 %v437, %v515
          %v517 = vpop.f32.mrf.mxu0
          %518 = vdwg.mxu0
          %519 = vadd.xlane.f32.xlu0 %v511
          %v520 = vpop.xlane.xlu0 %519
          %521 = vadd.xlane.f32.xlu0 %v516
          %v522 = vpop.xlane.xlu0 %521
          %v523 = vrcp.pop 128.0
          %v524 = vmul.f32 %v520, %v523
          %v525 = vmul.f32 %v522, %v523
          %v526 = vmul.f32 %v511, %v511
          %v527 = vmul.f32 %v516, %v516
          %528 = vadd.xlane.f32.xlu0 %v526
          %v529 = vpop.xlane.xlu0 %528
          %530 = vadd.xlane.f32.xlu0 %v527
          %v531 = vpop.xlane.xlu0 %530
          %v532 = vmul.f32 %v529, %v523
          %v533 = vmul.f32 %v531, %v523
          %v534 = vmul.f32 %v524, %v524
          %v535 = vmul.f32 %v525, %v525
          %v536 = vsub.f32 %v532, %v534
          %v537 = vsub.f32 %v533, %v535
          %v538 = vsub.f32 %v511, %v524
          %v539 = vsub.f32 %v516, %v525
          %v540 = vadd.f32 %v536, 1e-05
          %v541 = vadd.f32 %v537, 1e-05
          %v542 = vrsqrt.pop %v540
          %v543 = vrsqrt.pop %v541
          %v544 = vmul.f32 %v538, %v542
          %v545 = vmul.f32 %v539, %v543
          %v546 = vld [vmem:[%s3 + $0x1] sm:$0x1]
          %v547 = vlaneseq
          %v548 = vshrl.u32 %v547, 7
          %v549 = vsub.s32 0, %v548
          %v550 = vrot.slane %v546, %v549
          %v551 = vmul.f32 %v544, %v550
          %v552 = vmul.f32 %v545, %v550
          %v553 = vld [vmem:[%s3 + $0x2] sm:$0x1]
          %v554 = vlaneseq
          %v555 = vshrl.u32 %v554, 7
          %v556 = vsub.s32 0, %v555
          %v557 = vrot.slane %v553, %v556
          %v558 = vadd.f32 %v551, %v557
          %v559 = vadd.f32 %v552, %v557
          %560 = vst [vmem:[%s229] sm:$0xff] %v558
          %561 = vst [vmem:[%s229 + $0x8] sm:$0xff] %v559
        $region44: #{tpu_custom_call.1} parent=35 // pred_fallthru
          _
        %s562 = sand.u32 %s134, 1
        %s563 = scalar_lea.sflag [#allocation4], %s562
        %s564 = sand.u32 %s134, 1
        %s565 = smul.addr %s564, 16
        %s566 = scalar_lea.vmem [#allocation3], %s565
        // Predicated region
        $region45: #{tpu_custom_call.1} parent=35 // pred_check
          %p567 = pneg %p144
        $region46: #{tpu_custom_call.1} parent=35 // pred_check_branch
          %569 = sbr.rel (%p567) target = $region48
        $region47: #{tpu_custom_call.1} parent=35 // pred_region
          %s570 = smul.u32 2, %s22
          %s572 = ssub.s32 256, 256
          %573 = vsyncadd %s563, %s572
          %s574 = smul.addr %s570, 128
          %s575 = scalar_lea.hbm %s4, %s574
          %s576 = sshll.u32 %s566, 4
          %s577 = int_to_ptr.vmem [resolvable:$true] %s576
          %582 = dma.vmem_to_hbm [thread:$0]  %s577, 256, %s575, %s563, 128, 128, 8
        $region48: #{tpu_custom_call.1} parent=35 // pred_fallthru
          _
      $region36: #{tpu_custom_call.1} parent=5 // pred_fallthru
        _
      %p583 = scmp.le.s32.totalorder 2, %s13
      // Predicated region
      $region49: #{tpu_custom_call.1} parent=5 // pred_check
        %p584 = pneg %p583
      $region50: #{tpu_custom_call.1} parent=5 // pred_check_branch
        %586 = sbr.rel (%p584) target = $region52
      $region51: #{tpu_custom_call.1} parent=5 // pred_region
        %s587 = ssub.s32 %s13, 2
        // Predicated region
        $region53: #{tpu_custom_call.1} parent=51 // pred_check
          %p588 = pneg %p150
        $region54: #{tpu_custom_call.1} parent=51 // pred_check_branch
          %590 = sbr.rel (%p588) target = $region56
        $region55: #{tpu_custom_call.1} parent=51 // pred_region
          %s591 = sand.u32 %s135, 1
          %s592 = scalar_lea.sflag [#allocation4], %s591
          %s593 = sand.u32 %s135, 1
          %s594 = smul.addr %s593, 16
          %s595 = scalar_lea.vmem [#allocation3], %s594
          %596 = dma.done %s592, 256
        $region56: #{tpu_custom_call.1} parent=51 // pred_fallthru
          _
      $region52: #{tpu_custom_call.1} parent=5 // pred_fallthru
        _
    $region6: #{tpu_custom_call.1} parent=1 // loop_footer
      %s17 = sadd.s32 1, %s13
    $region7: #{tpu_custom_call.1} parent=1 // loop_footer_branch
      %12 = sbr.rel target = $region3
    $region8: #{tpu_custom_call.1} parent=1 // loop_exit
      _
    %597 = vsyncpa [#allocation4], 1
    %s598 = scalar_lea.sflag [#allocation4], 1
    %599 = vsyncpa %s598, 1

</llo_original>
